<compile_context>
chip_gen: v7x
topology: tpu7x:2x2x1
jax: 0.10.0
libtpu: 0.0.40
codegen_flags: <defaults>
</compile_context>

<pallas_src>
import numpy as np
import jax
import jax.numpy as jnp
from jax.experimental import pallas as pl
from jax.experimental.pallas import tpu as pltpu


# ---------------------------------------------------------------------------
# Static (host-side) pooling-matrix construction.
# ---------------------------------------------------------------------------
def _adaptive_pool_matrix(in_size: int, out_size: int) -> np.ndarray:
    """AdaptiveAvgPool1d as an (out, in) matrix: M[i, h] = 1/len(window_i)."""
    m = np.zeros((out_size, in_size), dtype=np.float32)
    for i in range(out_size):
        start = (i * in_size) // out_size
        end = -(-((i + 1) * in_size) // out_size)  # ceil
        m[i, start:end] = 1.0 / float(end - start)
    return m


def _avgpool_matrix(in_size: int, kernel_size: int, stride: int, padding: int) -> np.ndarray:
    """AvgPool1d (count_include_pad=True, ceil_mode=False) as an (out, in) matrix."""
    out_size = (in_size + 2 * padding - kernel_size) // stride + 1
    m = np.zeros((out_size, in_size), dtype=np.float32)
    for i in range(out_size):
        start = i * stride - padding
        end = start + kernel_size
        lo, hi = max(start, 0), min(end, in_size)
        m[i, lo:hi] = 1.0 / float(kernel_size)  # padded zeros contribute 0
    return m


# ---------------------------------------------------------------------------
# Pallas kernel: one lane-dense 2-D matmul per row tile.
# ---------------------------------------------------------------------------
def _pool_matmul_kernel(x_ref, kt_ref, o_ref):
    # x_ref : (TB, H*W)      tile of the flattened (N*C, H*W) input
    # kt_ref: (H*W, S_h*S_w) combined pooling matrix (constant across the grid)
    # o_ref : (TB, S_h*S_w)
    x = x_ref[...].astype(jnp.float32)
    o = jnp.dot(
        x,
        kt_ref[...],
        preferred_element_type=jnp.float32,
        precision=jax.lax.Precision.HIGHEST,  # full-f32 contraction on the MXU
    )
    o_ref[...] = o.astype(o_ref.dtype)


def _choose_block_rows(nc: int, hw: int, itemsize: int = 4,
                       target_bytes: int = 4 << 20, max_rows: int = 1024) -> int:
    """Row-tile size: ~4 MiB f32 input block, multiple of 8 (or full N*C)."""
    rows = max(8, min(target_bytes // max(1, hw * itemsize), max_rows))
    rows = max(8, int(rows) - int(rows) % 8)
    return nc if rows >= nc else rows


def _avg_pool2d_factored(x, ph: np.ndarray, pw: np.ndarray):
    """out[n, c] = ph @ x[n, c] @ pw.T with ph:(S_h,H), pw:(S_w,W); x: NCHW."""
    n, c, h, w = x.shape
    s_h, s_w = ph.shape[0], pw.shape[0]
    nc, hw, s2 = n * c, h * w, s_h * s_w

    x2d = x.reshape(nc, hw)
    kt = np.kron(ph, pw).T.astype(np.float32)  # (H*W, S_h*S_w)

    block_rows = _choose_block_rows(nc, hw)
    grid = (pl.cdiv(nc, block_rows),)

    itemsize = x.dtype.itemsize
    cost = pl.CostEstimate(
        flops=2 * nc * hw * s2,
        transcendentals=0,
        bytes_accessed=nc * hw * itemsize + nc * s2 * itemsize + kt.size * 4,
    )

    out2d = pl.pallas_call(
        _pool_matmul_kernel,
        out_shape=jax.ShapeDtypeStruct((nc, s2), x.dtype),
        grid=grid,
        in_specs=[
            pl.BlockSpec((block_rows, hw), lambda i: (i, 0)),
            pl.BlockSpec((hw, s2), lambda i: (0, 0)),
        ],
        out_specs=pl.BlockSpec((block_rows, s2), lambda i: (i, 0)),
        compiler_params=pltpu.CompilerParams(
            dimension_semantics=("parallel",),      # megacore-shard row tiles
            vmem_limit_bytes=48 * 1024 * 1024,      # headroom even on v7x (64 MiB)
        ),
        cost_estimate=cost,
    )(x2d, jnp.asarray(kt))

    return out2d.reshape(n, c, s_h, s_w)


# ---------------------------------------------------------------------------
# MultiPooling wrapper (matches the PyTorch module's forward semantics).
# ---------------------------------------------------------------------------
class MultiPooling:
    """Pooling layers for features from multiple depths (Pallas TPU port)."""

    POOL_PARAMS = {
        "resnet50": [
            dict(kernel_size=10, stride=10, padding=4),
            dict(kernel_size=16, stride=8, padding=0),
            dict(kernel_size=13, stride=5, padding=0),
            dict(kernel_size=8, stride=3, padding=0),
            dict(kernel_size=6, stride=1, padding=0),
        ]
    }
    POOL_SIZES = {"resnet50": [12, 6, 4, 3, 2]}
    POOL_DIMS = {"resnet50": [9216, 9216, 8192, 9216, 8192]}

    def __init__(self, pool_type="adaptive", in_indices=(0,), backbone="resnet50"):
        assert pool_type in ["adaptive", "specified"]
        self.pool_type = pool_type
        self.in_indices = tuple(in_indices)
        self.backbone = backbone

    def __call__(self, x):
        assert isinstance(x, (list, tuple))
        outs = []
        for l, xx in zip(self.in_indices, x):
            _, _, h, w = xx.shape
            if self.pool_type == "adaptive":
                s = self.POOL_SIZES[self.backbone][l]
                ph = _adaptive_pool_matrix(h, s)
                pw = _adaptive_pool_matrix(w, s)
            else:
                params = self.POOL_PARAMS[self.backbone][l]
                ph = _avgpool_matrix(h, **params)
                pw = _avgpool_matrix(w, **params)
            outs.append(_avg_pool2d_factored(xx, ph, pw))
        return outs


# ---------------------------------------------------------------------------
# Pure-numpy references (match torch AdaptiveAvgPool2d / AvgPool2d semantics).
# ---------------------------------------------------------------------------
def _adaptive_avg_pool2d_ref(x, out_size):
    n, c, h, w = x.shape
    out = np.zeros((n, c, out_size, out_size), dtype=np.float32)
    for i in range(out_size):
        hs, he = (i * h) // out_size, -(-((i + 1) * h) // out_size)
        for j in range(out_size):
            ws, we = (j * w) // out_size, -(-((j + 1) * w) // out_size)
            out[:, :, i, j] = x[:, :, hs:he, ws:we].mean(axis=(2, 3))
    return out


def _avg_pool2d_ref(x, kernel_size, stride, padding):
    n, c, h, w = x.shape
    oh = (h + 2 * padding - kernel_size) // stride + 1
    ow = (w + 2 * padding - kernel_size) // stride + 1
    xp = np.zeros((n, c, h + 2 * padding, w + 2 * padding), dtype=np.float32)
    xp[:, :, padding:padding + h, padding:padding + w] = x
    out = np.zeros((n, c, oh, ow), dtype=np.float32)
    for i in range(oh):
        for j in range(ow):
            win = xp[:, :, i * stride:i * stride + kernel_size,
                     j * stride:j * stride + kernel_size]
            out[:, :, i, j] = win.mean(axis=(2, 3))
    return out


if __name__ == "__main__":
    key = jax.random.PRNGKey(0)
    k0, k1 = jax.random.split(key)
    # Small NCHW features from two "depths": batch=2, channels=4, spatial=16x16.
    x0 = jax.random.normal(k0, (2, 4, 16, 16), dtype=jnp.float32)
    x1 = jax.random.normal(k1, (2, 4, 16, 16), dtype=jnp.float32)

    # Adaptive branch (default pool_type) over two depths -> sizes 12 and 6.
    mp = MultiPooling(pool_type="adaptive", in_indices=(0, 1), backbone="resnet50")
    outs = jax.block_until_ready(mp([x0, x1]))
    assert outs[0].shape == (2, 4, 12, 12), outs[0].shape
    assert outs[1].shape == (2, 4, 6, 6), outs[1].shape
    ref0 = _adaptive_avg_pool2d_ref(np.asarray(x0, np.float32), 12)
    ref1 = _adaptive_avg_pool2d_ref(np.asarray(x1, np.float32), 6)
    assert np.allclose(np.asarray(outs[0]), ref0, atol=1e-4, rtol=1e-4), (
        float(np.max(np.abs(np.asarray(outs[0]) - ref0))))
    assert np.allclose(np.asarray(outs[1]), ref1, atol=1e-4, rtol=1e-4), (
        float(np.max(np.abs(np.asarray(outs[1]) - ref1))))

    # Specified (AvgPool2d) branch, depth 0: kernel=10, stride=10, padding=4.
    mp_s = MultiPooling(pool_type="specified", in_indices=(0,), backbone="resnet50")
    outs_s = jax.block_until_ready(mp_s([x0]))
    ref_s = _avg_pool2d_ref(np.asarray(x0, np.float32), kernel_size=10, stride=10, padding=4)
    assert outs_s[0].shape == ref_s.shape, (outs_s[0].shape, ref_s.shape)
    assert np.allclose(np.asarray(outs_s[0]), ref_s, atol=1e-4, rtol=1e-4), (
        float(np.max(np.abs(np.asarray(outs_s[0]) - ref_s))))

    print("KERNEL_OK")
</pallas_src>

<mosaic_0001>
module attributes {stable_mosaic.version = 11 : i64} {
  func.func @_pool_matmul_kernel(%arg0: i32, %arg1: memref<8x256xf32, #tpu.memory_space<vmem>>, %arg2: memref<256x144xf32, #tpu.memory_space<vmem>>, %arg3: memref<8x144xf32, #tpu.memory_space<vmem>>) attributes {dimension_semantics = [#tpu.dimension_semantics<parallel>], iteration_bounds = array<i64: 1>, scalar_prefetch = 0 : i64, scratch_operands = 0 : i64, tpu.core_type = #tpu.core_type<tc>, window_params = [{transform_indices = @transform_0, window_bounds = array<i64: 8, 256>}, {pipeline_mode = #tpu.pipeline_mode<synchronous>, transform_indices = @transform_1, window_bounds = array<i64: 256, 144>}, {transform_indices = @transform_2, window_bounds = array<i64: 8, 144>}]} {
    %c0 = arith.constant 0 : index
    %c0_0 = arith.constant 0 : index
    %0 = vector.load %arg1[%c0, %c0_0] : memref<8x256xf32, #tpu.memory_space<vmem>>, vector<8x256xf32>
    %c0_1 = arith.constant 0 : index
    %c0_2 = arith.constant 0 : index
    %1 = vector.load %arg2[%c0_1, %c0_2] : memref<256x144xf32, #tpu.memory_space<vmem>>, vector<256x144xf32>
    %cst = arith.constant dense<0.000000e+00> : vector<8x144xf32>
    %2 = tpu.matmul %0, %1, %cst {dimension_numbers = #tpu.dot_dimension_numbers<[1], [0], [0], [1], [0, 0, 1, 1], [], []>, precision = #tpu.contract_precision<fp32>} : vector<8x256xf32>, vector<256x144xf32>, vector<8x144xf32> -> vector<8x144xf32>
    %c0_3 = arith.constant 0 : index
    %c0_4 = arith.constant 0 : index
    %3 = vector.load %arg3[%c0_3, %c0_4] : memref<8x144xf32, #tpu.memory_space<vmem>>, vector<8x144xf32>
    tpu.vector_store %arg3[%c0_3, %c0_4], %2 {strides = array<i32>} : memref<8x144xf32, #tpu.memory_space<vmem>>, vector<8x144xf32>,
    return
  }
  func.func @transform_0(%arg0: i32) -> (i32, i32) {
    %c0_i32 = arith.constant 0 : i32
    %c0_i32_0 = arith.constant 0 : i32
    return %arg0, %c0_i32 : i32, i32
  }
  func.func @transform_1(%arg0: i32) -> (i32, i32) {
    %c0_i32 = arith.constant 0 : i32
    %c0_i32_0 = arith.constant 0 : i32
    %c0_i32_1 = arith.constant 0 : i32
    return %c0_i32, %c0_i32_0 : i32, i32
  }
  func.func @transform_2(%arg0: i32) -> (i32, i32) {
    %c0_i32 = arith.constant 0 : i32
    %c0_i32_0 = arith.constant 0 : i32
    return %arg0, %c0_i32 : i32, i32
  }
}

</mosaic_0001>

<llo_original>
// kernel: tpu_custom_call.1
$region0: #{tpu_custom_call.1}
  #allocation0 [shape = 'u32[]', space=smem, size = 0x4, offset = 0x4, fixed_abs, tag = 'smem constant byte address 0x4 - core index']
  #allocation1 [shape = 'u32[144,128]{1,0:T(1,128)}', space=vmem, size = 0x12000, scoped, tag = 'internal scratch']
  %s0 = inlined_call_operand.vmem [shape: f32[8,256], index: 0, kind: input, shape index: {}]
  %s1 = inlined_call_operand.vmem [shape: f32[256,144], index: 1, kind: input, shape index: {}]
  %s2 = inlined_call_operand.hbm [shape: f32[8,144], index: 2, kind: output, shape index: {}]
  %s3 = sld [smem:[#allocation0]]
  $region18: #{tpu_custom_call.1} parent=0
    _
  %s5 = ssub.s32 1, %s3
  %s6 = scalar_select 0, %s5, %s3
  $region1: #{tpu_custom_call.1} parent=0
    #allocation2 [shape = 'u8[8192]{0}', space=vmem, size = 0x2000, scoped, tag = 'output window, operand 0, single buffered']
    #allocation3 [shape = 's32[1]{0}', space=sflag, size = 0x4, scoped, tag = 'scoped memory for tpu_custom_call.1']
    %7 = vsyncpa [#allocation3], 0
    // Predicated region
    $region2: #{tpu_custom_call.1} parent=1 // pred_check
      _
    $region3: #{tpu_custom_call.1} parent=1 // pred_check_branch
      %9 = sbr.rel (0) target = $region5
    $region4: #{tpu_custom_call.1} parent=1 // pred_region
      _
    $region5: #{tpu_custom_call.1} parent=1 // pred_fallthru
      _
    // Predicated region
    $region6: #{tpu_custom_call.1} parent=1 // pred_check
      _
    $region7: #{tpu_custom_call.1} parent=1 // pred_check_branch
      %11 = sbr.rel (0) target = $region9
    $region8: #{tpu_custom_call.1} parent=1 // pred_region
      _
    $region9: #{tpu_custom_call.1} parent=1 // pred_fallthru
      _
    %v12 = vld [vmem:[%s0] sm:$0xff]
    %v13 = vld [vmem:[%s0 + $0x8] sm:$0xff]
    %v14 = vld [vmem:[%s1] sm:$0xff]
    %v15 = vld [vmem:[%s1 + $0x8] sm:$0xff]
    %v16 = vld [vmem:[%s1 + $0x10] sm:$0xff]
    %v17 = vld [vmem:[%s1 + $0x18] sm:$0xff]
    %v18 = vld [vmem:[%s1 + $0x20] sm:$0xff]
    %v19 = vld [vmem:[%s1 + $0x28] sm:$0xff]
    %v20 = vld [vmem:[%s1 + $0x30] sm:$0xff]
    %v21 = vld [vmem:[%s1 + $0x38] sm:$0xff]
    %v22 = vld [vmem:[%s1 + $0x40] sm:$0xff]
    %v23 = vld [vmem:[%s1 + $0x48] sm:$0xff]
    %v24 = vld [vmem:[%s1 + $0x50] sm:$0xff]
    %v25 = vld [vmem:[%s1 + $0x58] sm:$0xff]
    %v26 = vld [vmem:[%s1 + $0x60] sm:$0xff]
    %v27 = vld [vmem:[%s1 + $0x68] sm:$0xff]
    %v28 = vld [vmem:[%s1 + $0x70] sm:$0xff]
    %v29 = vld [vmem:[%s1 + $0x78] sm:$0xff]
    %v30 = vld [vmem:[%s1 + $0x80] sm:$0xff]
    %v31 = vld [vmem:[%s1 + $0x88] sm:$0xff]
    %v32 = vld [vmem:[%s1 + $0x90] sm:$0xff]
    %v33 = vld [vmem:[%s1 + $0x98] sm:$0xff]
    %v34 = vld [vmem:[%s1 + $0xa0] sm:$0xff]
    %v35 = vld [vmem:[%s1 + $0xa8] sm:$0xff]
    %v36 = vld [vmem:[%s1 + $0xb0] sm:$0xff]
    %v37 = vld [vmem:[%s1 + $0xb8] sm:$0xff]
    %v38 = vld [vmem:[%s1 + $0xc0] sm:$0xff]
    %v39 = vld [vmem:[%s1 + $0xc8] sm:$0xff]
    %v40 = vld [vmem:[%s1 + $0xd0] sm:$0xff]
    %v41 = vld [vmem:[%s1 + $0xd8] sm:$0xff]
    %v42 = vld [vmem:[%s1 + $0xe0] sm:$0xff]
    %v43 = vld [vmem:[%s1 + $0xe8] sm:$0xff]
    %v44 = vld [vmem:[%s1 + $0xf0] sm:$0xff]
    %v45 = vld [vmem:[%s1 + $0xf8] sm:$0xff]
    %v46 = vld [vmem:[%s1 + $0x100] sm:$0xff]
    %v47 = vld [vmem:[%s1 + $0x108] sm:$0xff]
    %v48 = vld [vmem:[%s1 + $0x110] sm:$0xff]
    %v49 = vld [vmem:[%s1 + $0x118] sm:$0xff]
    %v50 = vld [vmem:[%s1 + $0x120] sm:$0xff]
    %v51 = vld [vmem:[%s1 + $0x128] sm:$0xff]
    %v52 = vld [vmem:[%s1 + $0x130] sm:$0xff]
    %v53 = vld [vmem:[%s1 + $0x138] sm:$0xff]
    %v54 = vld [vmem:[%s1 + $0x140] sm:$0xff]
    %v55 = vld [vmem:[%s1 + $0x148] sm:$0xff]
    %v56 = vld [vmem:[%s1 + $0x150] sm:$0xff]
    %v57 = vld [vmem:[%s1 + $0x158] sm:$0xff]
    %v58 = vld [vmem:[%s1 + $0x160] sm:$0xff]
    %v59 = vld [vmem:[%s1 + $0x168] sm:$0xff]
    %v60 = vld [vmem:[%s1 + $0x170] sm:$0xff]
    %v61 = vld [vmem:[%s1 + $0x178] sm:$0xff]
    %v62 = vld [vmem:[%s1 + $0x180] sm:$0xff]
    %v63 = vld [vmem:[%s1 + $0x188] sm:$0xff]
    %v64 = vld [vmem:[%s1 + $0x190] sm:$0xff]
    %v65 = vld [vmem:[%s1 + $0x198] sm:$0xff]
    %v66 = vld [vmem:[%s1 + $0x1a0] sm:$0xff]
    %v67 = vld [vmem:[%s1 + $0x1a8] sm:$0xff]
    %v68 = vld [vmem:[%s1 + $0x1b0] sm:$0xff]
    %v69 = vld [vmem:[%s1 + $0x1b8] sm:$0xff]
    %v70 = vld [vmem:[%s1 + $0x1c0] sm:$0xff]
    %v71 = vld [vmem:[%s1 + $0x1c8] sm:$0xff]
    %v72 = vld [vmem:[%s1 + $0x1d0] sm:$0xff]
    %v73 = vld [vmem:[%s1 + $0x1d8] sm:$0xff]
    %v74 = vld [vmem:[%s1 + $0x1e0] sm:$0xff]
    %v75 = vld [vmem:[%s1 + $0x1e8] sm:$0xff]
    %v76 = vld [vmem:[%s1 + $0x1f0] sm:$0xff]
    %v77 = vld [vmem:[%s1 + $0x1f8] sm:$0xff]
    %v78 = vand.u32 %v15, 4294901760
    %79 = vmatprep.subr.mxu0 %v78
    %v80 = vand.u32 %v14, 4294901760
    %81 = vmatpush1.msra.mxu0 %v80
    %v82 = vand.u32 %v17, 4294901760
    %83 = vmatprep.subr.mxu0 %v82
    %v84 = vand.u32 %v16, 4294901760
    %85 = vmatpush1.msra.mxu0 %v84
    %v86 = vand.u32 %v19, 4294901760
    %87 = vmatprep.subr.mxu0 %v86
    %v88 = vand.u32 %v18, 4294901760
    %89 = vmatpush1.msra.mxu0 %v88
    %v90 = vand.u32 %v21, 4294901760
    %91 = vmatprep.subr.mxu0 %v90
    %v92 = vand.u32 %v20, 4294901760
    %93 = vmatpush1.msra.mxu0 %v92
    %v94 = vand.u32 %v23, 4294901760
    %95 = vmatprep.subr.mxu0 %v94
    %v96 = vand.u32 %v22, 4294901760
    %97 = vmatpush1.msra.mxu0 %v96
    %v98 = vand.u32 %v25, 4294901760
    %99 = vmatprep.subr.mxu0 %v98
    %v100 = vand.u32 %v24, 4294901760
    %101 = vmatpush1.msra.mxu0 %v100
    %v102 = vand.u32 %v27, 4294901760
    %103 = vmatprep.subr.mxu0 %v102
    %v104 = vand.u32 %v26, 4294901760
    %105 = vmatpush1.msra.mxu0 %v104
    %v106 = vand.u32 %v29, 4294901760
    %107 = vmatprep.subr.mxu0 %v106
    %v108 = vand.u32 %v28, 4294901760
    %109 = vmatpush1.msra.mxu0 %v108
    %v110 = vand.u32 %v31, 4294901760
    %111 = vmatprep.subr.mxu0 %v110
    %v112 = vand.u32 %v30, 4294901760
    %113 = vmatpush1.msra.mxu0 %v112
    %v114 = vand.u32 %v33, 4294901760
    %115 = vmatprep.subr.mxu0 %v114
    %v116 = vand.u32 %v32, 4294901760
    %117 = vmatpush1.msra.mxu0 %v116
    %v118 = vand.u32 %v35, 4294901760
    %119 = vmatprep.subr.mxu0 %v118
    %v120 = vand.u32 %v34, 4294901760
    %121 = vmatpush1.msra.mxu0 %v120
    %v122 = vand.u32 %v37, 4294901760
    %123 = vmatprep.subr.mxu0 %v122
    %v124 = vand.u32 %v36, 4294901760
    %125 = vmatpush1.msra.mxu0 %v124
    %v126 = vand.u32 %v39, 4294901760
    %127 = vmatprep.subr.mxu0 %v126
    %v128 = vand.u32 %v38, 4294901760
    %129 = vmatpush1.msra.mxu0 %v128
    %v130 = vand.u32 %v41, 4294901760
    %131 = vmatprep.subr.mxu0 %v130
    %v132 = vand.u32 %v40, 4294901760
    %133 = vmatpush1.msra.mxu0 %v132
    %v134 = vand.u32 %v43, 4294901760
    %135 = vmatprep.subr.mxu0 %v134
    %v136 = vand.u32 %v42, 4294901760
    %137 = vmatpush1.msra.mxu0 %v136
    %v138 = vand.u32 %v45, 4294901760
    %139 = vmatprep.subr.mxu0 %v138
    %v140 = vand.u32 %v44, 4294901760
    %141 = vmatpush1.msra.mxu0 %v140
    %v142 = vand.u32 %v47, 4294901760
    %143 = vmatprep.subr.mxu0 %v142
    %v144 = vand.u32 %v46, 4294901760
    %145 = vmatpush1.msra.mxu0 %v144
    %v146 = vand.u32 %v49, 4294901760
    %147 = vmatprep.subr.mxu0 %v146
    %v148 = vand.u32 %v48, 4294901760
    %149 = vmatpush1.msra.mxu0 %v148
    %v150 = vand.u32 %v51, 4294901760
    %151 = vmatprep.subr.mxu0 %v150
    %v152 = vand.u32 %v50, 4294901760
    %153 = vmatpush1.msra.mxu0 %v152
    %v154 = vand.u32 %v53, 4294901760
    %155 = vmatprep.subr.mxu0 %v154
    %v156 = vand.u32 %v52, 4294901760
    %157 = vmatpush1.msra.mxu0 %v156
    %v158 = vand.u32 %v55, 4294901760
    %159 = vmatprep.subr.mxu0 %v158
    %v160 = vand.u32 %v54, 4294901760
    %161 = vmatpush1.msra.mxu0 %v160
    %v162 = vand.u32 %v57, 4294901760
    %163 = vmatprep.subr.mxu0 %v162
    %v164 = vand.u32 %v56, 4294901760
    %165 = vmatpush1.msra.mxu0 %v164
    %v166 = vand.u32 %v59, 4294901760
    %167 = vmatprep.subr.mxu0 %v166
    %v168 = vand.u32 %v58, 4294901760
    %169 = vmatpush1.msra.mxu0 %v168
    %v170 = vand.u32 %v61, 4294901760
    %171 = vmatprep.subr.mxu0 %v170
    %v172 = vand.u32 %v60, 4294901760
    %173 = vmatpush1.msra.mxu0 %v172
    %v174 = vand.u32 %v63, 4294901760
    %175 = vmatprep.subr.mxu0 %v174
    %v176 = vand.u32 %v62, 4294901760
    %177 = vmatpush1.msra.mxu0 %v176
    %v178 = vand.u32 %v65, 4294901760
    %179 = vmatprep.subr.mxu0 %v178
    %v180 = vand.u32 %v64, 4294901760
    %181 = vmatpush1.msra.mxu0 %v180
    %v182 = vand.u32 %v67, 4294901760
    %183 = vmatprep.subr.mxu0 %v182
    %v184 = vand.u32 %v66, 4294901760
    %185 = vmatpush1.msra.mxu0 %v184
    %v186 = vand.u32 %v69, 4294901760
    %187 = vmatprep.subr.mxu0 %v186
    %v188 = vand.u32 %v68, 4294901760
    %189 = vmatpush1.msra.mxu0 %v188
    %v190 = vand.u32 %v71, 4294901760
    %191 = vmatprep.subr.mxu0 %v190
    %v192 = vand.u32 %v70, 4294901760
    %193 = vmatpush1.msra.mxu0 %v192
    %v194 = vand.u32 %v73, 4294901760
    %195 = vmatprep.subr.mxu0 %v194
    %v196 = vand.u32 %v72, 4294901760
    %197 = vmatpush1.msra.mxu0 %v196
    %v198 = vand.u32 %v75, 4294901760
    %199 = vmatprep.subr.mxu0 %v198
    %v200 = vand.u32 %v74, 4294901760
    %201 = vmatpush1.msra.mxu0 %v200
    %v202 = vand.u32 %v77, 4294901760
    %203 = vmatprep.subr.mxu0 %v202
    %v204 = vand.u32 %v76, 4294901760
    %205 = vmatpush1.msra.mxu0 %v204
    %v206 = vand.u32 %v13, 4294901760
    %v207 = vsub.f32 %v13, %v206
    %v208 = vand.u32 %v207, 4294901760
    %v209 = vsub.f32 %v207, %v208
    %v210 = vand.u32 %v209, 4294901760
    %211 = vmatprep.mubr.f32.mxu0 %v210
    %v212 = vand.u32 %v12, 4294901760
    %v213 = vsub.f32 %v12, %v212
    %v214 = vand.u32 %v213, 4294901760
    %v215 = vsub.f32 %v213, %v214
    %v216 = vand.u32 %v215, 4294901760
    %217 = vmatmul.mubr.f32.gmra.mrb[0].mxu0 %v216
    %v218 = vpop.f32.mrb[0].mxu0
    %v219 = vadd.f32 0.0, %v218
    %v220 = vpop.f32.mrb[0].mxu0
    %v221 = vadd.f32 0.0, %v220
    %222 = vdwg.mxu0
    %v223 = vand.u32 %v15, 4294901760
    %v224 = vsub.f32 %v15, %v223
    %v225 = vand.u32 %v224, 4294901760
    %v226 = vsub.f32 %v224, %v225
    %v227 = vand.u32 %v226, 4294901760
    %228 = vmatprep.subr.mxu0 %v227
    %v229 = vand.u32 %v14, 4294901760
    %v230 = vsub.f32 %v14, %v229
    %v231 = vand.u32 %v230, 4294901760
    %v232 = vsub.f32 %v230, %v231
    %v233 = vand.u32 %v232, 4294901760
    %234 = vmatpush1.msra.mxu0 %v233
    %v235 = vand.u32 %v17, 4294901760
    %v236 = vsub.f32 %v17, %v235
    %v237 = vand.u32 %v236, 4294901760
    %v238 = vsub.f32 %v236, %v237
    %v239 = vand.u32 %v238, 4294901760
    %240 = vmatprep.subr.mxu0 %v239
    %v241 = vand.u32 %v16, 4294901760
    %v242 = vsub.f32 %v16, %v241
    %v243 = vand.u32 %v242, 4294901760
    %v244 = vsub.f32 %v242, %v243
    %v245 = vand.u32 %v244, 4294901760
    %246 = vmatpush1.msra.mxu0 %v245
    %v247 = vand.u32 %v19, 4294901760
    %v248 = vsub.f32 %v19, %v247
    %v249 = vand.u32 %v248, 4294901760
    %v250 = vsub.f32 %v248, %v249
    %v251 = vand.u32 %v250, 4294901760
    %252 = vmatprep.subr.mxu0 %v251
    %v253 = vand.u32 %v18, 4294901760
    %v254 = vsub.f32 %v18, %v253
    %v255 = vand.u32 %v254, 4294901760
    %v256 = vsub.f32 %v254, %v255
    %v257 = vand.u32 %v256, 4294901760
    %258 = vmatpush1.msra.mxu0 %v257
    %v259 = vand.u32 %v21, 4294901760
    %v260 = vsub.f32 %v21, %v259
    %v261 = vand.u32 %v260, 4294901760
    %v262 = vsub.f32 %v260, %v261
    %v263 = vand.u32 %v262, 4294901760
    %264 = vmatprep.subr.mxu0 %v263
    %v265 = vand.u32 %v20, 4294901760
    %v266 = vsub.f32 %v20, %v265
    %v267 = vand.u32 %v266, 4294901760
    %v268 = vsub.f32 %v266, %v267
    %v269 = vand.u32 %v268, 4294901760
    %270 = vmatpush1.msra.mxu0 %v269
    %v271 = vand.u32 %v23, 4294901760
    %v272 = vsub.f32 %v23, %v271
    %v273 = vand.u32 %v272, 4294901760
    %v274 = vsub.f32 %v272, %v273
    %v275 = vand.u32 %v274, 4294901760
    %276 = vmatprep.subr.mxu0 %v275
    %v277 = vand.u32 %v22, 4294901760
    %v278 = vsub.f32 %v22, %v277
    %v279 = vand.u32 %v278, 4294901760
    %v280 = vsub.f32 %v278, %v279
    %v281 = vand.u32 %v280, 4294901760
    %282 = vmatpush1.msra.mxu0 %v281
    %v283 = vand.u32 %v25, 4294901760
    %v284 = vsub.f32 %v25, %v283
    %v285 = vand.u32 %v284, 4294901760
    %v286 = vsub.f32 %v284, %v285
    %v287 = vand.u32 %v286, 4294901760
    %288 = vmatprep.subr.mxu0 %v287
    %v289 = vand.u32 %v24, 4294901760
    %v290 = vsub.f32 %v24, %v289
    %v291 = vand.u32 %v290, 4294901760
    %v292 = vsub.f32 %v290, %v291
    %v293 = vand.u32 %v292, 4294901760
    %294 = vmatpush1.msra.mxu0 %v293
    %v295 = vand.u32 %v27, 4294901760
    %v296 = vsub.f32 %v27, %v295
    %v297 = vand.u32 %v296, 4294901760
    %v298 = vsub.f32 %v296, %v297
    %v299 = vand.u32 %v298, 4294901760
    %300 = vmatprep.subr.mxu0 %v299
    %v301 = vand.u32 %v26, 4294901760
    %v302 = vsub.f32 %v26, %v301
    %v303 = vand.u32 %v302, 4294901760
    %v304 = vsub.f32 %v302, %v303
    %v305 = vand.u32 %v304, 4294901760
    %306 = vmatpush1.msra.mxu0 %v305
    %v307 = vand.u32 %v29, 4294901760
    %v308 = vsub.f32 %v29, %v307
    %v309 = vand.u32 %v308, 4294901760
    %v310 = vsub.f32 %v308, %v309
    %v311 = vand.u32 %v310, 4294901760
    %312 = vmatprep.subr.mxu0 %v311
    %v313 = vand.u32 %v28, 4294901760
    %v314 = vsub.f32 %v28, %v313
    %v315 = vand.u32 %v314, 4294901760
    %v316 = vsub.f32 %v314, %v315
    %v317 = vand.u32 %v316, 4294901760
    %318 = vmatpush1.msra.mxu0 %v317
    %v319 = vand.u32 %v31, 4294901760
    %v320 = vsub.f32 %v31, %v319
    %v321 = vand.u32 %v320, 4294901760
    %v322 = vsub.f32 %v320, %v321
    %v323 = vand.u32 %v322, 4294901760
    %324 = vmatprep.subr.mxu0 %v323
    %v325 = vand.u32 %v30, 4294901760
    %v326 = vsub.f32 %v30, %v325
    %v327 = vand.u32 %v326, 4294901760
    %v328 = vsub.f32 %v326, %v327
    %v329 = vand.u32 %v328, 4294901760
    %330 = vmatpush1.msra.mxu0 %v329
    %v331 = vand.u32 %v33, 4294901760
    %v332 = vsub.f32 %v33, %v331
    %v333 = vand.u32 %v332, 4294901760
    %v334 = vsub.f32 %v332, %v333
    %v335 = vand.u32 %v334, 4294901760
    %336 = vmatprep.subr.mxu0 %v335
    %v337 = vand.u32 %v32, 4294901760
    %v338 = vsub.f32 %v32, %v337
    %v339 = vand.u32 %v338, 4294901760
    %v340 = vsub.f32 %v338, %v339
    %v341 = vand.u32 %v340, 4294901760
    %342 = vmatpush1.msra.mxu0 %v341
    %v343 = vand.u32 %v35, 4294901760
    %v344 = vsub.f32 %v35, %v343
    %v345 = vand.u32 %v344, 4294901760
    %v346 = vsub.f32 %v344, %v345
    %v347 = vand.u32 %v346, 4294901760
    %348 = vmatprep.subr.mxu0 %v347
    %v349 = vand.u32 %v34, 4294901760
    %v350 = vsub.f32 %v34, %v349
    %v351 = vand.u32 %v350, 4294901760
    %v352 = vsub.f32 %v350, %v351
    %v353 = vand.u32 %v352, 4294901760
    %354 = vmatpush1.msra.mxu0 %v353
    %v355 = vand.u32 %v37, 4294901760
    %v356 = vsub.f32 %v37, %v355
    %v357 = vand.u32 %v356, 4294901760
    %v358 = vsub.f32 %v356, %v357
    %v359 = vand.u32 %v358, 4294901760
    %360 = vmatprep.subr.mxu0 %v359
    %v361 = vand.u32 %v36, 4294901760
    %v362 = vsub.f32 %v36, %v361
    %v363 = vand.u32 %v362, 4294901760
    %v364 = vsub.f32 %v362, %v363
    %v365 = vand.u32 %v364, 4294901760
    %366 = vmatpush1.msra.mxu0 %v365
    %v367 = vand.u32 %v39, 4294901760
    %v368 = vsub.f32 %v39, %v367
    %v369 = vand.u32 %v368, 4294901760
    %v370 = vsub.f32 %v368, %v369
    %v371 = vand.u32 %v370, 4294901760
    %372 = vmatprep.subr.mxu0 %v371
    %v373 = vand.u32 %v38, 4294901760
    %v374 = vsub.f32 %v38, %v373
    %v375 = vand.u32 %v374, 4294901760
    %v376 = vsub.f32 %v374, %v375
    %v377 = vand.u32 %v376, 4294901760
    %378 = vmatpush1.msra.mxu0 %v377
    %v379 = vand.u32 %v41, 4294901760
    %v380 = vsub.f32 %v41, %v379
    %v381 = vand.u32 %v380, 4294901760
    %v382 = vsub.f32 %v380, %v381
    %v383 = vand.u32 %v382, 4294901760
    %384 = vmatprep.subr.mxu0 %v383
    %v385 = vand.u32 %v40, 4294901760
    %v386 = vsub.f32 %v40, %v385
    %v387 = vand.u32 %v386, 4294901760
    %v388 = vsub.f32 %v386, %v387
    %v389 = vand.u32 %v388, 4294901760
    %390 = vmatpush1.msra.mxu0 %v389
    %v391 = vand.u32 %v43, 4294901760
    %v392 = vsub.f32 %v43, %v391
    %v393 = vand.u32 %v392, 4294901760
    %v394 = vsub.f32 %v392, %v393
    %v395 = vand.u32 %v394, 4294901760
    %396 = vmatprep.subr.mxu0 %v395
    %v397 = vand.u32 %v42, 4294901760
    %v398 = vsub.f32 %v42, %v397
    %v399 = vand.u32 %v398, 4294901760
    %v400 = vsub.f32 %v398, %v399
    %v401 = vand.u32 %v400, 4294901760
    %402 = vmatpush1.msra.mxu0 %v401
    %v403 = vand.u32 %v45, 4294901760
    %v404 = vsub.f32 %v45, %v403
    %v405 = vand.u32 %v404, 4294901760
    %v406 = vsub.f32 %v404, %v405
    %v407 = vand.u32 %v406, 4294901760
    %408 = vmatprep.subr.mxu0 %v407
    %v409 = vand.u32 %v44, 4294901760
    %v410 = vsub.f32 %v44, %v409
    %v411 = vand.u32 %v410, 4294901760
    %v412 = vsub.f32 %v410, %v411
    %v413 = vand.u32 %v412, 4294901760
    %414 = vmatpush1.msra.mxu0 %v413
    %v415 = vand.u32 %v47, 4294901760
    %v416 = vsub.f32 %v47, %v415
    %v417 = vand.u32 %v416, 4294901760
    %v418 = vsub.f32 %v416, %v417
    %v419 = vand.u32 %v418, 4294901760
    %420 = vmatprep.subr.mxu0 %v419
    %v421 = vand.u32 %v46, 4294901760
    %v422 = vsub.f32 %v46, %v421
    %v423 = vand.u32 %v422, 4294901760
    %v424 = vsub.f32 %v422, %v423
    %v425 = vand.u32 %v424, 4294901760
    %426 = vmatpush1.msra.mxu0 %v425
    %v427 = vand.u32 %v49, 4294901760
    %v428 = vsub.f32 %v49, %v427
    %v429 = vand.u32 %v428, 4294901760
    %v430 = vsub.f32 %v428, %v429
    %v431 = vand.u32 %v430, 4294901760
    %432 = vmatprep.subr.mxu0 %v431
    %v433 = vand.u32 %v48, 4294901760
    %v434 = vsub.f32 %v48, %v433
    %v435 = vand.u32 %v434, 4294901760
    %v436 = vsub.f32 %v434, %v435
    %v437 = vand.u32 %v436, 4294901760
    %438 = vmatpush1.msra.mxu0 %v437
    %v439 = vand.u32 %v51, 4294901760
    %v440 = vsub.f32 %v51, %v439
    %v441 = vand.u32 %v440, 4294901760
    %v442 = vsub.f32 %v440, %v441
    %v443 = vand.u32 %v442, 4294901760
    %444 = vmatprep.subr.mxu0 %v443
    %v445 = vand.u32 %v50, 4294901760
    %v446 = vsub.f32 %v50, %v445
    %v447 = vand.u32 %v446, 4294901760
    %v448 = vsub.f32 %v446, %v447
    %v449 = vand.u32 %v448, 4294901760
    %450 = vmatpush1.msra.mxu0 %v449
    %v451 = vand.u32 %v53, 4294901760
    %v452 = vsub.f32 %v53, %v451
    %v453 = vand.u32 %v452, 4294901760
    %v454 = vsub.f32 %v452, %v453
    %v455 = vand.u32 %v454, 4294901760
    %456 = vmatprep.subr.mxu0 %v455
    %v457 = vand.u32 %v52, 4294901760
    %v458 = vsub.f32 %v52, %v457
    %v459 = vand.u32 %v458, 4294901760
    %v460 = vsub.f32 %v458, %v459
    %v461 = vand.u32 %v460, 4294901760
    %462 = vmatpush1.msra.mxu0 %v461
    %v463 = vand.u32 %v55, 4294901760
    %v464 = vsub.f32 %v55, %v463
    %v465 = vand.u32 %v464, 4294901760
    %v466 = vsub.f32 %v464, %v465
    %v467 = vand.u32 %v466, 4294901760
    %468 = vmatprep.subr.mxu0 %v467
    %v469 = vand.u32 %v54, 4294901760
    %v470 = vsub.f32 %v54, %v469
    %v471 = vand.u32 %v470, 4294901760
    %v472 = vsub.f32 %v470, %v471
    %v473 = vand.u32 %v472, 4294901760
    %474 = vmatpush1.msra.mxu0 %v473
    %v475 = vand.u32 %v57, 4294901760
    %v476 = vsub.f32 %v57, %v475
    %v477 = vand.u32 %v476, 4294901760
    %v478 = vsub.f32 %v476, %v477
    %v479 = vand.u32 %v478, 4294901760
    %480 = vmatprep.subr.mxu0 %v479
    %v481 = vand.u32 %v56, 4294901760
    %v482 = vsub.f32 %v56, %v481
    %v483 = vand.u32 %v482, 4294901760
    %v484 = vsub.f32 %v482, %v483
    %v485 = vand.u32 %v484, 4294901760
    %486 = vmatpush1.msra.mxu0 %v485
    %v487 = vand.u32 %v59, 4294901760
    %v488 = vsub.f32 %v59, %v487
    %v489 = vand.u32 %v488, 4294901760
    %v490 = vsub.f32 %v488, %v489
    %v491 = vand.u32 %v490, 4294901760
    %492 = vmatprep.subr.mxu0 %v491
    %v493 = vand.u32 %v58, 4294901760
    %v494 = vsub.f32 %v58, %v493
    %v495 = vand.u32 %v494, 4294901760
    %v496 = vsub.f32 %v494, %v495
    %v497 = vand.u32 %v496, 4294901760
    %498 = vmatpush1.msra.mxu0 %v497
    %v499 = vand.u32 %v61, 4294901760
    %v500 = vsub.f32 %v61, %v499
    %v501 = vand.u32 %v500, 4294901760
    %v502 = vsub.f32 %v500, %v501
    %v503 = vand.u32 %v502, 4294901760
    %504 = vmatprep.subr.mxu0 %v503
    %v505 = vand.u32 %v60, 4294901760
    %v506 = vsub.f32 %v60, %v505
    %v507 = vand.u32 %v506, 4294901760
    %v508 = vsub.f32 %v506, %v507
    %v509 = vand.u32 %v508, 4294901760
    %510 = vmatpush1.msra.mxu0 %v509
    %v511 = vand.u32 %v63, 4294901760
    %v512 = vsub.f32 %v63, %v511
    %v513 = vand.u32 %v512, 4294901760
    %v514 = vsub.f32 %v512, %v513
    %v515 = vand.u32 %v514, 4294901760
    %516 = vmatprep.subr.mxu0 %v515
    %v517 = vand.u32 %v62, 4294901760
    %v518 = vsub.f32 %v62, %v517
    %v519 = vand.u32 %v518, 4294901760
    %v520 = vsub.f32 %v518, %v519
    %v521 = vand.u32 %v520, 4294901760
    %522 = vmatpush1.msra.mxu0 %v521
    %v523 = vand.u32 %v65, 4294901760
    %v524 = vsub.f32 %v65, %v523
    %v525 = vand.u32 %v524, 4294901760
    %v526 = vsub.f32 %v524, %v525
    %v527 = vand.u32 %v526, 4294901760
    %528 = vmatprep.subr.mxu0 %v527
    %v529 = vand.u32 %v64, 4294901760
    %v530 = vsub.f32 %v64, %v529
    %v531 = vand.u32 %v530, 4294901760
    %v532 = vsub.f32 %v530, %v531
    %v533 = vand.u32 %v532, 4294901760
    %534 = vmatpush1.msra.mxu0 %v533
    %v535 = vand.u32 %v67, 4294901760
    %v536 = vsub.f32 %v67, %v535
    %v537 = vand.u32 %v536, 4294901760
    %v538 = vsub.f32 %v536, %v537
    %v539 = vand.u32 %v538, 4294901760
    %540 = vmatprep.subr.mxu0 %v539
    %v541 = vand.u32 %v66, 4294901760
    %v542 = vsub.f32 %v66, %v541
    %v543 = vand.u32 %v542, 4294901760
    %v544 = vsub.f32 %v542, %v543
    %v545 = vand.u32 %v544, 4294901760
    %546 = vmatpush1.msra.mxu0 %v545
    %v547 = vand.u32 %v69, 4294901760
    %v548 = vsub.f32 %v69, %v547
    %v549 = vand.u32 %v548, 4294901760
    %v550 = vsub.f32 %v548, %v549
    %v551 = vand.u32 %v550, 4294901760
    %552 = vmatprep.subr.mxu0 %v551
    %v553 = vand.u32 %v68, 4294901760
    %v554 = vsub.f32 %v68, %v553
    %v555 = vand.u32 %v554, 4294901760
    %v556 = vsub.f32 %v554, %v555
    %v557 = vand.u32 %v556, 4294901760
    %558 = vmatpush1.msra.mxu0 %v557
    %v559 = vand.u32 %v71, 4294901760
    %v560 = vsub.f32 %v71, %v559
    %v561 = vand.u32 %v560, 4294901760
    %v562 = vsub.f32 %v560, %v561
    %v563 = vand.u32 %v562, 4294901760
    %564 = vmatprep.subr.mxu0 %v563
    %v565 = vand.u32 %v70, 4294901760
    %v566 = vsub.f32 %v70, %v565
    %v567 = vand.u32 %v566, 4294901760
    %v568 = vsub.f32 %v566, %v567
    %v569 = vand.u32 %v568, 4294901760
    %570 = vmatpush1.msra.mxu0 %v569
    %v571 = vand.u32 %v73, 4294901760
    %v572 = vsub.f32 %v73, %v571
    %v573 = vand.u32 %v572, 4294901760
    %v574 = vsub.f32 %v572, %v573
    %v575 = vand.u32 %v574, 4294901760
    %576 = vmatprep.subr.mxu0 %v575
    %v577 = vand.u32 %v72, 4294901760
    %v578 = vsub.f32 %v72, %v577
    %v579 = vand.u32 %v578, 4294901760
    %v580 = vsub.f32 %v578, %v579
    %v581 = vand.u32 %v580, 4294901760
    %582 = vmatpush1.msra.mxu0 %v581
    %v583 = vand.u32 %v75, 4294901760
    %v584 = vsub.f32 %v75, %v583
    %v585 = vand.u32 %v584, 4294901760
    %v586 = vsub.f32 %v584, %v585
    %v587 = vand.u32 %v586, 4294901760
    %588 = vmatprep.subr.mxu0 %v587
    %v589 = vand.u32 %v74, 4294901760
    %v590 = vsub.f32 %v74, %v589
    %v591 = vand.u32 %v590, 4294901760
    %v592 = vsub.f32 %v590, %v591
    %v593 = vand.u32 %v592, 4294901760
    %594 = vmatpush1.msra.mxu0 %v593
    %v595 = vand.u32 %v77, 4294901760
    %v596 = vsub.f32 %v77, %v595
    %v597 = vand.u32 %v596, 4294901760
    %v598 = vsub.f32 %v596, %v597
    %v599 = vand.u32 %v598, 4294901760
    %600 = vmatprep.subr.mxu0 %v599
    %v601 = vand.u32 %v76, 4294901760
    %v602 = vsub.f32 %v76, %v601
    %v603 = vand.u32 %v602, 4294901760
    %v604 = vsub.f32 %v602, %v603
    %v605 = vand.u32 %v604, 4294901760
    %606 = vmatpush1.msra.mxu0 %v605
    %v607 = vand.u32 %v13, 4294901760
    %608 = vmatprep.mubr.f32.mxu0 %v607
    %v609 = vand.u32 %v12, 4294901760
    %610 = vmatmul.mubr.f32.gmra.mrb[0].mxu0 %v609
    %v611 = vpop.f32.mrb[0].mxu0
    %v612 = vadd.f32 %v219, %v611
    %v613 = vpop.f32.mrb[0].mxu0
    %v614 = vadd.f32 %v221, %v613
    %615 = vdwg.mxu0
    %v616 = vand.u32 %v15, 4294901760
    %v617 = vsub.f32 %v15, %v616
    %618 = vmatprep.subr.mxu0 %v617
    %v619 = vand.u32 %v14, 4294901760
    %v620 = vsub.f32 %v14, %v619
    %621 = vmatpush1.msra.mxu0 %v620
    %v622 = vand.u32 %v17, 4294901760
    %v623 = vsub.f32 %v17, %v622
    %624 = vmatprep.subr.mxu0 %v623
    %v625 = vand.u32 %v16, 4294901760
    %v626 = vsub.f32 %v16, %v625
    %627 = vmatpush1.msra.mxu0 %v626
    %v628 = vand.u32 %v19, 4294901760
    %v629 = vsub.f32 %v19, %v628
    %630 = vmatprep.subr.mxu0 %v629
    %v631 = vand.u32 %v18, 4294901760
    %v632 = vsub.f32 %v18, %v631
    %633 = vmatpush1.msra.mxu0 %v632
    %v634 = vand.u32 %v21, 4294901760
    %v635 = vsub.f32 %v21, %v634
    %636 = vmatprep.subr.mxu0 %v635
    %v637 = vand.u32 %v20, 4294901760
    %v638 = vsub.f32 %v20, %v637
    %639 = vmatpush1.msra.mxu0 %v638
    %v640 = vand.u32 %v23, 4294901760
    %v641 = vsub.f32 %v23, %v640
    %642 = vmatprep.subr.mxu0 %v641
    %v643 = vand.u32 %v22, 4294901760
    %v644 = vsub.f32 %v22, %v643
    %645 = vmatpush1.msra.mxu0 %v644
    %v646 = vand.u32 %v25, 4294901760
    %v647 = vsub.f32 %v25, %v646
    %648 = vmatprep.subr.mxu0 %v647
    %v649 = vand.u32 %v24, 4294901760
    %v650 = vsub.f32 %v24, %v649
    %651 = vmatpush1.msra.mxu0 %v650
    %v652 = vand.u32 %v27, 4294901760
    %v653 = vsub.f32 %v27, %v652
    %654 = vmatprep.subr.mxu0 %v653
    %v655 = vand.u32 %v26, 4294901760
    %v656 = vsub.f32 %v26, %v655
    %657 = vmatpush1.msra.mxu0 %v656
    %v658 = vand.u32 %v29, 4294901760
    %v659 = vsub.f32 %v29, %v658
    %660 = vmatprep.subr.mxu0 %v659
    %v661 = vand.u32 %v28, 4294901760
    %v662 = vsub.f32 %v28, %v661
    %663 = vmatpush1.msra.mxu0 %v662
    %v664 = vand.u32 %v31, 4294901760
    %v665 = vsub.f32 %v31, %v664
    %666 = vmatprep.subr.mxu0 %v665
    %v667 = vand.u32 %v30, 4294901760
    %v668 = vsub.f32 %v30, %v667
    %669 = vmatpush1.msra.mxu0 %v668
    %v670 = vand.u32 %v33, 4294901760
    %v671 = vsub.f32 %v33, %v670
    %672 = vmatprep.subr.mxu0 %v671
    %v673 = vand.u32 %v32, 4294901760
    %v674 = vsub.f32 %v32, %v673
    %675 = vmatpush1.msra.mxu0 %v674
    %v676 = vand.u32 %v35, 4294901760
    %v677 = vsub.f32 %v35, %v676
    %678 = vmatprep.subr.mxu0 %v677
    %v679 = vand.u32 %v34, 4294901760
    %v680 = vsub.f32 %v34, %v679
    %681 = vmatpush1.msra.mxu0 %v680
    %v682 = vand.u32 %v37, 4294901760
    %v683 = vsub.f32 %v37, %v682
    %684 = vmatprep.subr.mxu0 %v683
    %v685 = vand.u32 %v36, 4294901760
    %v686 = vsub.f32 %v36, %v685
    %687 = vmatpush1.msra.mxu0 %v686
    %v688 = vand.u32 %v39, 4294901760
    %v689 = vsub.f32 %v39, %v688
    %690 = vmatprep.subr.mxu0 %v689
    %v691 = vand.u32 %v38, 4294901760
    %v692 = vsub.f32 %v38, %v691
    %693 = vmatpush1.msra.mxu0 %v692
    %v694 = vand.u32 %v41, 4294901760
    %v695 = vsub.f32 %v41, %v694
    %696 = vmatprep.subr.mxu0 %v695
    %v697 = vand.u32 %v40, 4294901760
    %v698 = vsub.f32 %v40, %v697
    %699 = vmatpush1.msra.mxu0 %v698
    %v700 = vand.u32 %v43, 4294901760
    %v701 = vsub.f32 %v43, %v700
    %702 = vmatprep.subr.mxu0 %v701
    %v703 = vand.u32 %v42, 4294901760
    %v704 = vsub.f32 %v42, %v703
    %705 = vmatpush1.msra.mxu0 %v704
    %v706 = vand.u32 %v45, 4294901760
    %v707 = vsub.f32 %v45, %v706
    %708 = vmatprep.subr.mxu0 %v707
    %v709 = vand.u32 %v44, 4294901760
    %v710 = vsub.f32 %v44, %v709
    %711 = vmatpush1.msra.mxu0 %v710
    %v712 = vand.u32 %v47, 4294901760
    %v713 = vsub.f32 %v47, %v712
    %714 = vmatprep.subr.mxu0 %v713
    %v715 = vand.u32 %v46, 4294901760
    %v716 = vsub.f32 %v46, %v715
    %717 = vmatpush1.msra.mxu0 %v716
    %v718 = vand.u32 %v49, 4294901760
    %v719 = vsub.f32 %v49, %v718
    %720 = vmatprep.subr.mxu0 %v719
    %v721 = vand.u32 %v48, 4294901760
    %v722 = vsub.f32 %v48, %v721
    %723 = vmatpush1.msra.mxu0 %v722
    %v724 = vand.u32 %v51, 4294901760
    %v725 = vsub.f32 %v51, %v724
    %726 = vmatprep.subr.mxu0 %v725
    %v727 = vand.u32 %v50, 4294901760
    %v728 = vsub.f32 %v50, %v727
    %729 = vmatpush1.msra.mxu0 %v728
    %v730 = vand.u32 %v53, 4294901760
    %v731 = vsub.f32 %v53, %v730
    %732 = vmatprep.subr.mxu0 %v731
    %v733 = vand.u32 %v52, 4294901760
    %v734 = vsub.f32 %v52, %v733
    %735 = vmatpush1.msra.mxu0 %v734
    %v736 = vand.u32 %v55, 4294901760
    %v737 = vsub.f32 %v55, %v736
    %738 = vmatprep.subr.mxu0 %v737
    %v739 = vand.u32 %v54, 4294901760
    %v740 = vsub.f32 %v54, %v739
    %741 = vmatpush1.msra.mxu0 %v740
    %v742 = vand.u32 %v57, 4294901760
    %v743 = vsub.f32 %v57, %v742
    %744 = vmatprep.subr.mxu0 %v743
    %v745 = vand.u32 %v56, 4294901760
    %v746 = vsub.f32 %v56, %v745
    %747 = vmatpush1.msra.mxu0 %v746
    %v748 = vand.u32 %v59, 4294901760
    %v749 = vsub.f32 %v59, %v748
    %750 = vmatprep.subr.mxu0 %v749
    %v751 = vand.u32 %v58, 4294901760
    %v752 = vsub.f32 %v58, %v751
    %753 = vmatpush1.msra.mxu0 %v752
    %v754 = vand.u32 %v61, 4294901760
    %v755 = vsub.f32 %v61, %v754
    %756 = vmatprep.subr.mxu0 %v755
    %v757 = vand.u32 %v60, 4294901760
    %v758 = vsub.f32 %v60, %v757
    %759 = vmatpush1.msra.mxu0 %v758
    %v760 = vand.u32 %v63, 4294901760
    %v761 = vsub.f32 %v63, %v760
    %762 = vmatprep.subr.mxu0 %v761
    %v763 = vand.u32 %v62, 4294901760
    %v764 = vsub.f32 %v62, %v763
    %765 = vmatpush1.msra.mxu0 %v764
    %v766 = vand.u32 %v65, 4294901760
    %v767 = vsub.f32 %v65, %v766
    %768 = vmatprep.subr.mxu0 %v767
    %v769 = vand.u32 %v64, 4294901760
    %v770 = vsub.f32 %v64, %v769
    %771 = vmatpush1.msra.mxu0 %v770
    %v772 = vand.u32 %v67, 4294901760
    %v773 = vsub.f32 %v67, %v772
    %774 = vmatprep.subr.mxu0 %v773
    %v775 = vand.u32 %v66, 4294901760
    %v776 = vsub.f32 %v66, %v775
    %777 = vmatpush1.msra.mxu0 %v776
    %v778 = vand.u32 %v69, 4294901760
    %v779 = vsub.f32 %v69, %v778
    %780 = vmatprep.subr.mxu0 %v779
    %v781 = vand.u32 %v68, 4294901760
    %v782 = vsub.f32 %v68, %v781
    %783 = vmatpush1.msra.mxu0 %v782
    %v784 = vand.u32 %v71, 4294901760
    %v785 = vsub.f32 %v71, %v784
    %786 = vmatprep.subr.mxu0 %v785
    %v787 = vand.u32 %v70, 4294901760
    %v788 = vsub.f32 %v70, %v787
    %789 = vmatpush1.msra.mxu0 %v788
    %v790 = vand.u32 %v73, 4294901760
    %v791 = vsub.f32 %v73, %v790
    %792 = vmatprep.subr.mxu0 %v791
    %v793 = vand.u32 %v72, 4294901760
    %v794 = vsub.f32 %v72, %v793
    %795 = vmatpush1.msra.mxu0 %v794
    %v796 = vand.u32 %v75, 4294901760
    %v797 = vsub.f32 %v75, %v796
    %798 = vmatprep.subr.mxu0 %v797
    %v799 = vand.u32 %v74, 4294901760
    %v800 = vsub.f32 %v74, %v799
    %801 = vmatpush1.msra.mxu0 %v800
    %v802 = vand.u32 %v77, 4294901760
    %v803 = vsub.f32 %v77, %v802
    %804 = vmatprep.subr.mxu0 %v803
    %v805 = vand.u32 %v76, 4294901760
    %v806 = vsub.f32 %v76, %v805
    %807 = vmatpush1.msra.mxu0 %v806
    %v808 = vand.u32 %v13, 4294901760
    %v809 = vsub.f32 %v13, %v808
    %810 = vmatprep.mubr.f32.mxu0 %v809
    %v811 = vand.u32 %v12, 4294901760
    %v812 = vsub.f32 %v12, %v811
    %813 = vmatmul.mubr.f32.gmra.mrb[0].mxu0 %v812
    %v814 = vpop.f32.mrb[0].mxu0
    %v815 = vadd.f32 %v612, %v814
    %v816 = vpop.f32.mrb[0].mxu0
    %v817 = vadd.f32 %v614, %v816
    %818 = vdwg.mxu0
    %v819 = vand.u32 %v15, 4294901760
    %820 = vmatprep.subr.mxu0 %v819
    %v821 = vand.u32 %v14, 4294901760
    %822 = vmatpush1.msra.mxu0 %v821
    %v823 = vand.u32 %v17, 4294901760
    %824 = vmatprep.subr.mxu0 %v823
    %v825 = vand.u32 %v16, 4294901760
    %826 = vmatpush1.msra.mxu0 %v825
    %v827 = vand.u32 %v19, 4294901760
    %828 = vmatprep.subr.mxu0 %v827
    %v829 = vand.u32 %v18, 4294901760
    %830 = vmatpush1.msra.mxu0 %v829
    %v831 = vand.u32 %v21, 4294901760
    %832 = vmatprep.subr.mxu0 %v831
    %v833 = vand.u32 %v20, 4294901760
    %834 = vmatpush1.msra.mxu0 %v833
    %v835 = vand.u32 %v23, 4294901760
    %836 = vmatprep.subr.mxu0 %v835
    %v837 = vand.u32 %v22, 4294901760
    %838 = vmatpush1.msra.mxu0 %v837
    %v839 = vand.u32 %v25, 4294901760
    %840 = vmatprep.subr.mxu0 %v839
    %v841 = vand.u32 %v24, 4294901760
    %842 = vmatpush1.msra.mxu0 %v841
    %v843 = vand.u32 %v27, 4294901760
    %844 = vmatprep.subr.mxu0 %v843
    %v845 = vand.u32 %v26, 4294901760
    %846 = vmatpush1.msra.mxu0 %v845
    %v847 = vand.u32 %v29, 4294901760
    %848 = vmatprep.subr.mxu0 %v847
    %v849 = vand.u32 %v28, 4294901760
    %850 = vmatpush1.msra.mxu0 %v849
    %v851 = vand.u32 %v31, 4294901760
    %852 = vmatprep.subr.mxu0 %v851
    %v853 = vand.u32 %v30, 4294901760
    %854 = vmatpush1.msra.mxu0 %v853
    %v855 = vand.u32 %v33, 4294901760
    %856 = vmatprep.subr.mxu0 %v855
    %v857 = vand.u32 %v32, 4294901760
    %858 = vmatpush1.msra.mxu0 %v857
    %v859 = vand.u32 %v35, 4294901760
    %860 = vmatprep.subr.mxu0 %v859
    %v861 = vand.u32 %v34, 4294901760
    %862 = vmatpush1.msra.mxu0 %v861
    %v863 = vand.u32 %v37, 4294901760
    %864 = vmatprep.subr.mxu0 %v863
    %v865 = vand.u32 %v36, 4294901760
    %866 = vmatpush1.msra.mxu0 %v865
    %v867 = vand.u32 %v39, 4294901760
    %868 = vmatprep.subr.mxu0 %v867
    %v869 = vand.u32 %v38, 4294901760
    %870 = vmatpush1.msra.mxu0 %v869
    %v871 = vand.u32 %v41, 4294901760
    %872 = vmatprep.subr.mxu0 %v871
    %v873 = vand.u32 %v40, 4294901760
    %874 = vmatpush1.msra.mxu0 %v873
    %v875 = vand.u32 %v43, 4294901760
    %876 = vmatprep.subr.mxu0 %v875
    %v877 = vand.u32 %v42, 4294901760
    %878 = vmatpush1.msra.mxu0 %v877
    %v879 = vand.u32 %v45, 4294901760
    %880 = vmatprep.subr.mxu0 %v879
    %v881 = vand.u32 %v44, 4294901760
    %882 = vmatpush1.msra.mxu0 %v881
    %v883 = vand.u32 %v47, 4294901760
    %884 = vmatprep.subr.mxu0 %v883
    %v885 = vand.u32 %v46, 4294901760
    %886 = vmatpush1.msra.mxu0 %v885
    %v887 = vand.u32 %v49, 4294901760
    %888 = vmatprep.subr.mxu0 %v887
    %v889 = vand.u32 %v48, 4294901760
    %890 = vmatpush1.msra.mxu0 %v889
    %v891 = vand.u32 %v51, 4294901760
    %892 = vmatprep.subr.mxu0 %v891
    %v893 = vand.u32 %v50, 4294901760
    %894 = vmatpush1.msra.mxu0 %v893
    %v895 = vand.u32 %v53, 4294901760
    %896 = vmatprep.subr.mxu0 %v895
    %v897 = vand.u32 %v52, 4294901760
    %898 = vmatpush1.msra.mxu0 %v897
    %v899 = vand.u32 %v55, 4294901760
    %900 = vmatprep.subr.mxu0 %v899
    %v901 = vand.u32 %v54, 4294901760
    %902 = vmatpush1.msra.mxu0 %v901
    %v903 = vand.u32 %v57, 4294901760
    %904 = vmatprep.subr.mxu0 %v903
    %v905 = vand.u32 %v56, 4294901760
    %906 = vmatpush1.msra.mxu0 %v905
    %v907 = vand.u32 %v59, 4294901760
    %908 = vmatprep.subr.mxu0 %v907
    %v909 = vand.u32 %v58, 4294901760
    %910 = vmatpush1.msra.mxu0 %v909
    %v911 = vand.u32 %v61, 4294901760
    %912 = vmatprep.subr.mxu0 %v911
    %v913 = vand.u32 %v60, 4294901760
    %914 = vmatpush1.msra.mxu0 %v913
    %v915 = vand.u32 %v63, 4294901760
    %916 = vmatprep.subr.mxu0 %v915
    %v917 = vand.u32 %v62, 4294901760
    %918 = vmatpush1.msra.mxu0 %v917
    %v919 = vand.u32 %v65, 4294901760
    %920 = vmatprep.subr.mxu0 %v919
    %v921 = vand.u32 %v64, 4294901760
    %922 = vmatpush1.msra.mxu0 %v921
    %v923 = vand.u32 %v67, 4294901760
    %924 = vmatprep.subr.mxu0 %v923
    %v925 = vand.u32 %v66, 4294901760
    %926 = vmatpush1.msra.mxu0 %v925
    %v927 = vand.u32 %v69, 4294901760
    %928 = vmatprep.subr.mxu0 %v927
    %v929 = vand.u32 %v68, 4294901760
    %930 = vmatpush1.msra.mxu0 %v929
    %v931 = vand.u32 %v71, 4294901760
    %932 = vmatprep.subr.mxu0 %v931
    %v933 = vand.u32 %v70, 4294901760
    %934 = vmatpush1.msra.mxu0 %v933
    %v935 = vand.u32 %v73, 4294901760
    %936 = vmatprep.subr.mxu0 %v935
    %v937 = vand.u32 %v72, 4294901760
    %938 = vmatpush1.msra.mxu0 %v937
    %v939 = vand.u32 %v75, 4294901760
    %940 = vmatprep.subr.mxu0 %v939
    %v941 = vand.u32 %v74, 4294901760
    %942 = vmatpush1.msra.mxu0 %v941
    %v943 = vand.u32 %v77, 4294901760
    %944 = vmatprep.subr.mxu0 %v943
    %v945 = vand.u32 %v76, 4294901760
    %946 = vmatpush1.msra.mxu0 %v945
    %v947 = vand.u32 %v13, 4294901760
    %v948 = vsub.f32 %v13, %v947
    %v949 = vand.u32 %v948, 4294901760
    %950 = vmatprep.mubr.f32.mxu0 %v949
    %v951 = vand.u32 %v12, 4294901760
    %v952 = vsub.f32 %v12, %v951
    %v953 = vand.u32 %v952, 4294901760
    %954 = vmatmul.mubr.f32.gmra.mrb[0].mxu0 %v953
    %v955 = vpop.f32.mrb[0].mxu0
    %v956 = vadd.f32 %v815, %v955
    %v957 = vpop.f32.mrb[0].mxu0
    %v958 = vadd.f32 %v817, %v957
    %959 = vdwg.mxu0
    %v960 = vand.u32 %v15, 4294901760
    %v961 = vsub.f32 %v15, %v960
    %v962 = vand.u32 %v961, 4294901760
    %963 = vmatprep.subr.mxu0 %v962
    %v964 = vand.u32 %v14, 4294901760
    %v965 = vsub.f32 %v14, %v964
    %v966 = vand.u32 %v965, 4294901760
    %967 = vmatpush1.msra.mxu0 %v966
    %v968 = vand.u32 %v17, 4294901760
    %v969 = vsub.f32 %v17, %v968
    %v970 = vand.u32 %v969, 4294901760
    %971 = vmatprep.subr.mxu0 %v970
    %v972 = vand.u32 %v16, 4294901760
    %v973 = vsub.f32 %v16, %v972
    %v974 = vand.u32 %v973, 4294901760
    %975 = vmatpush1.msra.mxu0 %v974
    %v976 = vand.u32 %v19, 4294901760
    %v977 = vsub.f32 %v19, %v976
    %v978 = vand.u32 %v977, 4294901760
    %979 = vmatprep.subr.mxu0 %v978
    %v980 = vand.u32 %v18, 4294901760
    %v981 = vsub.f32 %v18, %v980
    %v982 = vand.u32 %v981, 4294901760
    %983 = vmatpush1.msra.mxu0 %v982
    %v984 = vand.u32 %v21, 4294901760
    %v985 = vsub.f32 %v21, %v984
    %v986 = vand.u32 %v985, 4294901760
    %987 = vmatprep.subr.mxu0 %v986
    %v988 = vand.u32 %v20, 4294901760
    %v989 = vsub.f32 %v20, %v988
    %v990 = vand.u32 %v989, 4294901760
    %991 = vmatpush1.msra.mxu0 %v990
    %v992 = vand.u32 %v23, 4294901760
    %v993 = vsub.f32 %v23, %v992
    %v994 = vand.u32 %v993, 4294901760
    %995 = vmatprep.subr.mxu0 %v994
    %v996 = vand.u32 %v22, 4294901760
    %v997 = vsub.f32 %v22, %v996
    %v998 = vand.u32 %v997, 4294901760
    %999 = vmatpush1.msra.mxu0 %v998
    %v1000 = vand.u32 %v25, 4294901760
    %v1001 = vsub.f32 %v25, %v1000
    %v1002 = vand.u32 %v1001, 4294901760
    %1003 = vmatprep.subr.mxu0 %v1002
    %v1004 = vand.u32 %v24, 4294901760
    %v1005 = vsub.f32 %v24, %v1004
    %v1006 = vand.u32 %v1005, 4294901760
    %1007 = vmatpush1.msra.mxu0 %v1006
    %v1008 = vand.u32 %v27, 4294901760
    %v1009 = vsub.f32 %v27, %v1008
    %v1010 = vand.u32 %v1009, 4294901760
    %1011 = vmatprep.subr.mxu0 %v1010
    %v1012 = vand.u32 %v26, 4294901760
    %v1013 = vsub.f32 %v26, %v1012
    %v1014 = vand.u32 %v1013, 4294901760
    %1015 = vmatpush1.msra.mxu0 %v1014
    %v1016 = vand.u32 %v29, 4294901760
    %v1017 = vsub.f32 %v29, %v1016
    %v1018 = vand.u32 %v1017, 4294901760
    %1019 = vmatprep.subr.mxu0 %v1018
    %v1020 = vand.u32 %v28, 4294901760
    %v1021 = vsub.f32 %v28, %v1020
    %v1022 = vand.u32 %v1021, 4294901760
    %1023 = vmatpush1.msra.mxu0 %v1022
    %v1024 = vand.u32 %v31, 4294901760
    %v1025 = vsub.f32 %v31, %v1024
    %v1026 = vand.u32 %v1025, 4294901760
    %1027 = vmatprep.subr.mxu0 %v1026
    %v1028 = vand.u32 %v30, 4294901760
    %v1029 = vsub.f32 %v30, %v1028
    %v1030 = vand.u32 %v1029, 4294901760
    %1031 = vmatpush1.msra.mxu0 %v1030
    %v1032 = vand.u32 %v33, 4294901760
    %v1033 = vsub.f32 %v33, %v1032
    %v1034 = vand.u32 %v1033, 4294901760
    %1035 = vmatprep.subr.mxu0 %v1034
    %v1036 = vand.u32 %v32, 4294901760
    %v1037 = vsub.f32 %v32, %v1036
    %v1038 = vand.u32 %v1037, 4294901760
    %1039 = vmatpush1.msra.mxu0 %v1038
    %v1040 = vand.u32 %v35, 4294901760
    %v1041 = vsub.f32 %v35, %v1040
    %v1042 = vand.u32 %v1041, 4294901760
    %1043 = vmatprep.subr.mxu0 %v1042
    %v1044 = vand.u32 %v34, 4294901760
    %v1045 = vsub.f32 %v34, %v1044
    %v1046 = vand.u32 %v1045, 4294901760
    %1047 = vmatpush1.msra.mxu0 %v1046
    %v1048 = vand.u32 %v37, 4294901760
    %v1049 = vsub.f32 %v37, %v1048
    %v1050 = vand.u32 %v1049, 4294901760
    %1051 = vmatprep.subr.mxu0 %v1050
    %v1052 = vand.u32 %v36, 4294901760
    %v1053 = vsub.f32 %v36, %v1052
    %v1054 = vand.u32 %v1053, 4294901760
    %1055 = vmatpush1.msra.mxu0 %v1054
    %v1056 = vand.u32 %v39, 4294901760
    %v1057 = vsub.f32 %v39, %v1056
    %v1058 = vand.u32 %v1057, 4294901760
    %1059 = vmatprep.subr.mxu0 %v1058
    %v1060 = vand.u32 %v38, 4294901760
    %v1061 = vsub.f32 %v38, %v1060
    %v1062 = vand.u32 %v1061, 4294901760
    %1063 = vmatpush1.msra.mxu0 %v1062
    %v1064 = vand.u32 %v41, 4294901760
    %v1065 = vsub.f32 %v41, %v1064
    %v1066 = vand.u32 %v1065, 4294901760
    %1067 = vmatprep.subr.mxu0 %v1066
    %v1068 = vand.u32 %v40, 4294901760
    %v1069 = vsub.f32 %v40, %v1068
    %v1070 = vand.u32 %v1069, 4294901760
    %1071 = vmatpush1.msra.mxu0 %v1070
    %v1072 = vand.u32 %v43, 4294901760
    %v1073 = vsub.f32 %v43, %v1072
    %v1074 = vand.u32 %v1073, 4294901760
    %1075 = vmatprep.subr.mxu0 %v1074
    %v1076 = vand.u32 %v42, 4294901760
    %v1077 = vsub.f32 %v42, %v1076
    %v1078 = vand.u32 %v1077, 4294901760
    %1079 = vmatpush1.msra.mxu0 %v1078
    %v1080 = vand.u32 %v45, 4294901760
    %v1081 = vsub.f32 %v45, %v1080
    %v1082 = vand.u32 %v1081, 4294901760
    %1083 = vmatprep.subr.mxu0 %v1082
    %v1084 = vand.u32 %v44, 4294901760
    %v1085 = vsub.f32 %v44, %v1084
    %v1086 = vand.u32 %v1085, 4294901760
    %1087 = vmatpush1.msra.mxu0 %v1086
    %v1088 = vand.u32 %v47, 4294901760
    %v1089 = vsub.f32 %v47, %v1088
    %v1090 = vand.u32 %v1089, 4294901760
    %1091 = vmatprep.subr.mxu0 %v1090
    %v1092 = vand.u32 %v46, 4294901760
    %v1093 = vsub.f32 %v46, %v1092
    %v1094 = vand.u32 %v1093, 4294901760
    %1095 = vmatpush1.msra.mxu0 %v1094
    %v1096 = vand.u32 %v49, 4294901760
    %v1097 = vsub.f32 %v49, %v1096
    %v1098 = vand.u32 %v1097, 4294901760
    %1099 = vmatprep.subr.mxu0 %v1098
    %v1100 = vand.u32 %v48, 4294901760
    %v1101 = vsub.f32 %v48, %v1100
    %v1102 = vand.u32 %v1101, 4294901760
    %1103 = vmatpush1.msra.mxu0 %v1102
    %v1104 = vand.u32 %v51, 4294901760
    %v1105 = vsub.f32 %v51, %v1104
    %v1106 = vand.u32 %v1105, 4294901760
    %1107 = vmatprep.subr.mxu0 %v1106
    %v1108 = vand.u32 %v50, 4294901760
    %v1109 = vsub.f32 %v50, %v1108
    %v1110 = vand.u32 %v1109, 4294901760
    %1111 = vmatpush1.msra.mxu0 %v1110
    %v1112 = vand.u32 %v53, 4294901760
    %v1113 = vsub.f32 %v53, %v1112
    %v1114 = vand.u32 %v1113, 4294901760
    %1115 = vmatprep.subr.mxu0 %v1114
    %v1116 = vand.u32 %v52, 4294901760
    %v1117 = vsub.f32 %v52, %v1116
    %v1118 = vand.u32 %v1117, 4294901760
    %1119 = vmatpush1.msra.mxu0 %v1118
    %v1120 = vand.u32 %v55, 4294901760
    %v1121 = vsub.f32 %v55, %v1120
    %v1122 = vand.u32 %v1121, 4294901760
    %1123 = vmatprep.subr.mxu0 %v1122
    %v1124 = vand.u32 %v54, 4294901760
    %v1125 = vsub.f32 %v54, %v1124
    %v1126 = vand.u32 %v1125, 4294901760
    %1127 = vmatpush1.msra.mxu0 %v1126
    %v1128 = vand.u32 %v57, 4294901760
    %v1129 = vsub.f32 %v57, %v1128
    %v1130 = vand.u32 %v1129, 4294901760
    %1131 = vmatprep.subr.mxu0 %v1130
    %v1132 = vand.u32 %v56, 4294901760
    %v1133 = vsub.f32 %v56, %v1132
    %v1134 = vand.u32 %v1133, 4294901760
    %1135 = vmatpush1.msra.mxu0 %v1134
    %v1136 = vand.u32 %v59, 4294901760
    %v1137 = vsub.f32 %v59, %v1136
    %v1138 = vand.u32 %v1137, 4294901760
    %1139 = vmatprep.subr.mxu0 %v1138
    %v1140 = vand.u32 %v58, 4294901760
    %v1141 = vsub.f32 %v58, %v1140
    %v1142 = vand.u32 %v1141, 4294901760
    %1143 = vmatpush1.msra.mxu0 %v1142
    %v1144 = vand.u32 %v61, 4294901760
    %v1145 = vsub.f32 %v61, %v1144
    %v1146 = vand.u32 %v1145, 4294901760
    %1147 = vmatprep.subr.mxu0 %v1146
    %v1148 = vand.u32 %v60, 4294901760
    %v1149 = vsub.f32 %v60, %v1148
    %v1150 = vand.u32 %v1149, 4294901760
    %1151 = vmatpush1.msra.mxu0 %v1150
    %v1152 = vand.u32 %v63, 4294901760
    %v1153 = vsub.f32 %v63, %v1152
    %v1154 = vand.u32 %v1153, 4294901760
    %1155 = vmatprep.subr.mxu0 %v1154
    %v1156 = vand.u32 %v62, 4294901760
    %v1157 = vsub.f32 %v62, %v1156
    %v1158 = vand.u32 %v1157, 4294901760
    %1159 = vmatpush1.msra.mxu0 %v1158
    %v1160 = vand.u32 %v65, 4294901760
    %v1161 = vsub.f32 %v65, %v1160
    %v1162 = vand.u32 %v1161, 4294901760
    %1163 = vmatprep.subr.mxu0 %v1162
    %v1164 = vand.u32 %v64, 4294901760
    %v1165 = vsub.f32 %v64, %v1164
    %v1166 = vand.u32 %v1165, 4294901760
    %1167 = vmatpush1.msra.mxu0 %v1166
    %v1168 = vand.u32 %v67, 4294901760
    %v1169 = vsub.f32 %v67, %v1168
    %v1170 = vand.u32 %v1169, 4294901760
    %1171 = vmatprep.subr.mxu0 %v1170
    %v1172 = vand.u32 %v66, 4294901760
    %v1173 = vsub.f32 %v66, %v1172
    %v1174 = vand.u32 %v1173, 4294901760
    %1175 = vmatpush1.msra.mxu0 %v1174
    %v1176 = vand.u32 %v69, 4294901760
    %v1177 = vsub.f32 %v69, %v1176
    %v1178 = vand.u32 %v1177, 4294901760
    %1179 = vmatprep.subr.mxu0 %v1178
    %v1180 = vand.u32 %v68, 4294901760
    %v1181 = vsub.f32 %v68, %v1180
    %v1182 = vand.u32 %v1181, 4294901760
    %1183 = vmatpush1.msra.mxu0 %v1182
    %v1184 = vand.u32 %v71, 4294901760
    %v1185 = vsub.f32 %v71, %v1184
    %v1186 = vand.u32 %v1185, 4294901760
    %1187 = vmatprep.subr.mxu0 %v1186
    %v1188 = vand.u32 %v70, 4294901760
    %v1189 = vsub.f32 %v70, %v1188
    %v1190 = vand.u32 %v1189, 4294901760
    %1191 = vmatpush1.msra.mxu0 %v1190
    %v1192 = vand.u32 %v73, 4294901760
    %v1193 = vsub.f32 %v73, %v1192
    %v1194 = vand.u32 %v1193, 4294901760
    %1195 = vmatprep.subr.mxu0 %v1194
    %v1196 = vand.u32 %v72, 4294901760
    %v1197 = vsub.f32 %v72, %v1196
    %v1198 = vand.u32 %v1197, 4294901760
    %1199 = vmatpush1.msra.mxu0 %v1198
    %v1200 = vand.u32 %v75, 4294901760
    %v1201 = vsub.f32 %v75, %v1200
    %v1202 = vand.u32 %v1201, 4294901760
    %1203 = vmatprep.subr.mxu0 %v1202
    %v1204 = vand.u32 %v74, 4294901760
    %v1205 = vsub.f32 %v74, %v1204
    %v1206 = vand.u32 %v1205, 4294901760
    %1207 = vmatpush1.msra.mxu0 %v1206
    %v1208 = vand.u32 %v77, 4294901760
    %v1209 = vsub.f32 %v77, %v1208
    %v1210 = vand.u32 %v1209, 4294901760
    %1211 = vmatprep.subr.mxu0 %v1210
    %v1212 = vand.u32 %v76, 4294901760
    %v1213 = vsub.f32 %v76, %v1212
    %v1214 = vand.u32 %v1213, 4294901760
    %1215 = vmatpush1.msra.mxu0 %v1214
    %v1216 = vand.u32 %v13, 4294901760
    %1217 = vmatprep.mubr.f32.mxu0 %v1216
    %v1218 = vand.u32 %v12, 4294901760
    %1219 = vmatmul.mubr.f32.gmra.mrb[0].mxu0 %v1218
    %v1220 = vpop.f32.mrb[0].mxu0
    %v1221 = vadd.f32 %v956, %v1220
    %v1222 = vpop.f32.mrb[0].mxu0
    %v1223 = vadd.f32 %v958, %v1222
    %1224 = vdwg.mxu0
    %v1225 = vand.u32 %v15, 4294901760
    %1226 = vmatprep.subr.mxu0 %v1225
    %v1227 = vand.u32 %v14, 4294901760
    %1228 = vmatpush1.msra.mxu0 %v1227
    %v1229 = vand.u32 %v17, 4294901760
    %1230 = vmatprep.subr.mxu0 %v1229
    %v1231 = vand.u32 %v16, 4294901760
    %1232 = vmatpush1.msra.mxu0 %v1231
    %v1233 = vand.u32 %v19, 4294901760
    %1234 = vmatprep.subr.mxu0 %v1233
    %v1235 = vand.u32 %v18, 4294901760
    %1236 = vmatpush1.msra.mxu0 %v1235
    %v1237 = vand.u32 %v21, 4294901760
    %1238 = vmatprep.subr.mxu0 %v1237
    %v1239 = vand.u32 %v20, 4294901760
    %1240 = vmatpush1.msra.mxu0 %v1239
    %v1241 = vand.u32 %v23, 4294901760
    %1242 = vmatprep.subr.mxu0 %v1241
    %v1243 = vand.u32 %v22, 4294901760
    %1244 = vmatpush1.msra.mxu0 %v1243
    %v1245 = vand.u32 %v25, 4294901760
    %1246 = vmatprep.subr.mxu0 %v1245
    %v1247 = vand.u32 %v24, 4294901760
    %1248 = vmatpush1.msra.mxu0 %v1247
    %v1249 = vand.u32 %v27, 4294901760
    %1250 = vmatprep.subr.mxu0 %v1249
    %v1251 = vand.u32 %v26, 4294901760
    %1252 = vmatpush1.msra.mxu0 %v1251
    %v1253 = vand.u32 %v29, 4294901760
    %1254 = vmatprep.subr.mxu0 %v1253
    %v1255 = vand.u32 %v28, 4294901760
    %1256 = vmatpush1.msra.mxu0 %v1255
    %v1257 = vand.u32 %v31, 4294901760
    %1258 = vmatprep.subr.mxu0 %v1257
    %v1259 = vand.u32 %v30, 4294901760
    %1260 = vmatpush1.msra.mxu0 %v1259
    %v1261 = vand.u32 %v33, 4294901760
    %1262 = vmatprep.subr.mxu0 %v1261
    %v1263 = vand.u32 %v32, 4294901760
    %1264 = vmatpush1.msra.mxu0 %v1263
    %v1265 = vand.u32 %v35, 4294901760
    %1266 = vmatprep.subr.mxu0 %v1265
    %v1267 = vand.u32 %v34, 4294901760
    %1268 = vmatpush1.msra.mxu0 %v1267
    %v1269 = vand.u32 %v37, 4294901760
    %1270 = vmatprep.subr.mxu0 %v1269
    %v1271 = vand.u32 %v36, 4294901760
    %1272 = vmatpush1.msra.mxu0 %v1271
    %v1273 = vand.u32 %v39, 4294901760
    %1274 = vmatprep.subr.mxu0 %v1273
    %v1275 = vand.u32 %v38, 4294901760
    %1276 = vmatpush1.msra.mxu0 %v1275
    %v1277 = vand.u32 %v41, 4294901760
    %1278 = vmatprep.subr.mxu0 %v1277
    %v1279 = vand.u32 %v40, 4294901760
    %1280 = vmatpush1.msra.mxu0 %v1279
    %v1281 = vand.u32 %v43, 4294901760
    %1282 = vmatprep.subr.mxu0 %v1281
    %v1283 = vand.u32 %v42, 4294901760
    %1284 = vmatpush1.msra.mxu0 %v1283
    %v1285 = vand.u32 %v45, 4294901760
    %1286 = vmatprep.subr.mxu0 %v1285
    %v1287 = vand.u32 %v44, 4294901760
    %1288 = vmatpush1.msra.mxu0 %v1287
    %v1289 = vand.u32 %v47, 4294901760
    %1290 = vmatprep.subr.mxu0 %v1289
    %v1291 = vand.u32 %v46, 4294901760
    %1292 = vmatpush1.msra.mxu0 %v1291
    %v1293 = vand.u32 %v49, 4294901760
    %1294 = vmatprep.subr.mxu0 %v1293
    %v1295 = vand.u32 %v48, 4294901760
    %1296 = vmatpush1.msra.mxu0 %v1295
    %v1297 = vand.u32 %v51, 4294901760
    %1298 = vmatprep.subr.mxu0 %v1297
    %v1299 = vand.u32 %v50, 4294901760
    %1300 = vmatpush1.msra.mxu0 %v1299
    %v1301 = vand.u32 %v53, 4294901760
    %1302 = vmatprep.subr.mxu0 %v1301
    %v1303 = vand.u32 %v52, 4294901760
    %1304 = vmatpush1.msra.mxu0 %v1303
    %v1305 = vand.u32 %v55, 4294901760
    %1306 = vmatprep.subr.mxu0 %v1305
    %v1307 = vand.u32 %v54, 4294901760
    %1308 = vmatpush1.msra.mxu0 %v1307
    %v1309 = vand.u32 %v57, 4294901760
    %1310 = vmatprep.subr.mxu0 %v1309
    %v1311 = vand.u32 %v56, 4294901760
    %1312 = vmatpush1.msra.mxu0 %v1311
    %v1313 = vand.u32 %v59, 4294901760
    %1314 = vmatprep.subr.mxu0 %v1313
    %v1315 = vand.u32 %v58, 4294901760
    %1316 = vmatpush1.msra.mxu0 %v1315
    %v1317 = vand.u32 %v61, 4294901760
    %1318 = vmatprep.subr.mxu0 %v1317
    %v1319 = vand.u32 %v60, 4294901760
    %1320 = vmatpush1.msra.mxu0 %v1319
    %v1321 = vand.u32 %v63, 4294901760
    %1322 = vmatprep.subr.mxu0 %v1321
    %v1323 = vand.u32 %v62, 4294901760
    %1324 = vmatpush1.msra.mxu0 %v1323
    %v1325 = vand.u32 %v65, 4294901760
    %1326 = vmatprep.subr.mxu0 %v1325
    %v1327 = vand.u32 %v64, 4294901760
    %1328 = vmatpush1.msra.mxu0 %v1327
    %v1329 = vand.u32 %v67, 4294901760
    %1330 = vmatprep.subr.mxu0 %v1329
    %v1331 = vand.u32 %v66, 4294901760
    %1332 = vmatpush1.msra.mxu0 %v1331
    %v1333 = vand.u32 %v69, 4294901760
    %1334 = vmatprep.subr.mxu0 %v1333
    %v1335 = vand.u32 %v68, 4294901760
    %1336 = vmatpush1.msra.mxu0 %v1335
    %v1337 = vand.u32 %v71, 4294901760
    %1338 = vmatprep.subr.mxu0 %v1337
    %v1339 = vand.u32 %v70, 4294901760
    %1340 = vmatpush1.msra.mxu0 %v1339
    %v1341 = vand.u32 %v73, 4294901760
    %1342 = vmatprep.subr.mxu0 %v1341
    %v1343 = vand.u32 %v72, 4294901760
    %1344 = vmatpush1.msra.mxu0 %v1343
    %v1345 = vand.u32 %v75, 4294901760
    %1346 = vmatprep.subr.mxu0 %v1345
    %v1347 = vand.u32 %v74, 4294901760
    %1348 = vmatpush1.msra.mxu0 %v1347
    %v1349 = vand.u32 %v77, 4294901760
    %1350 = vmatprep.subr.mxu0 %v1349
    %v1351 = vand.u32 %v76, 4294901760
    %1352 = vmatpush1.msra.mxu0 %v1351
    %v1353 = vand.u32 %v13, 4294901760
    %1354 = vmatprep.mubr.f32.mxu0 %v1353
    %v1355 = vand.u32 %v12, 4294901760
    %1356 = vmatmul.mubr.f32.gmra.mrb[0].mxu0 %v1355
    %v1357 = vpop.f32.mrb[0].mxu0
    %v1358 = vadd.f32 %v1221, %v1357
    %v1359 = vpop.f32.mrb[0].mxu0
    %v1360 = vadd.f32 %v1223, %v1359
    %1361 = vdwg.mxu0
    %1362 = vst [vmem:[#allocation2] sm:$0xff] %v1358
    %vm1363 = vcmask 130048
    %1364 = vst.msk [vmem:[#allocation2 + $0x8] sm:$0xff] %vm1363, %v1360
    // Predicated region
    $region10: #{tpu_custom_call.1} parent=1 // pred_check
      _
    $region11: #{tpu_custom_call.1} parent=1 // pred_check_branch
      %1366 = sbr.rel (0) target = $region13
    $region12: #{tpu_custom_call.1} parent=1 // pred_region
      %s1368 = ssub.s32 256, 256
      %1369 = vsyncadd [#allocation3], %s1368
      %s1371 = sshll.u32 [#allocation2], 4
      %s1372 = int_to_ptr.vmem [resolvable:$true] %s1371
      %1374 = dma.vmem_to_hbm [thread:$0]  %s1372, 256, %s2, [#allocation3]
    $region13: #{tpu_custom_call.1} parent=1 // pred_fallthru
      _
    // Predicated region
    $region14: #{tpu_custom_call.1} parent=1 // pred_check
      _
    $region15: #{tpu_custom_call.1} parent=1 // pred_check_branch
      %1376 = sbr.rel (0) target = $region17
    $region16: #{tpu_custom_call.1} parent=1 // pred_region
      %1377 = dma.done [#allocation3], 256
    $region17: #{tpu_custom_call.1} parent=1 // pred_fallthru
      _
    %1378 = vsyncpa [#allocation3], 1

</llo_original>
